<compile_context>
chip_gen: v7x
topology: tpu7x:2x2x1
jax: 0.10.0
libtpu: 0.0.40
codegen_flags: <defaults>
</compile_context>

<pallas_src>
import jax
import jax.numpy as jnp
from jax.experimental import pallas as pl
from jax.experimental.pallas import tpu as pltpu


def critic_kernel(s_ref, a_ref,
                  ws_ref, wa_ref, b14_ref,
                  w2_ref, b2_ref, w5_ref, b5_ref,
                  w36_ref, b36_ref,
                  out_ref):
    hidden = w2_ref.shape[0]

    # Fused layer 1 of both heads: sa @ [W1 | W4] without materializing the
    # concat.  bf16 MXU operands, f32 accumulation; elementwise stays f32.
    s_bf = s_ref[...].astype(jnp.bfloat16)
    a_bf = a_ref[...].astype(jnp.bfloat16)
    hg = (jnp.dot(s_bf, ws_ref[...], preferred_element_type=jnp.float32)
          + jnp.dot(a_bf, wa_ref[...], preferred_element_type=jnp.float32)
          + b14_ref[...])
    hg = jnp.maximum(hg, 0.0)
    h = hg[:, :hidden]            # Q1 branch (slice at lane-aligned 256 boundary)
    g = hg[:, hidden:]            # Q2 branch

    # Layer 2 of each head: 256x256 bf16 MXU matmuls with f32 accumulation.
    h = jnp.maximum(
        jnp.dot(h.astype(jnp.bfloat16), w2_ref[...],
                preferred_element_type=jnp.float32) + b2_ref[...],
        0.0)
    g = jnp.maximum(
        jnp.dot(g.astype(jnp.bfloat16), w5_ref[...],
                preferred_element_type=jnp.float32) + b5_ref[...],
        0.0)

    # 256 -> 1 tails: f32 VPU multiply + lane reduction (avoids an N=1 matmul
    # that would waste 255/256 of the MXU output lanes).
    q1 = jnp.sum(h * w36_ref[0:1, :], axis=-1, keepdims=True)   # (TB, 1)
    q2 = jnp.sum(g * w36_ref[1:2, :], axis=-1, keepdims=True)   # (TB, 1)

    # Pack both heads into one (TB, 2) tile and store once (no 1-lane stores).
    lane = jax.lax.broadcasted_iota(jnp.int32, out_ref.shape, 1)
    q = jnp.where(lane == 0, q1, q2) + b36_ref[...]
    out_ref[...] = q.astype(out_ref.dtype)


def _round_up(x, m):
    return ((x + m - 1) // m) * m


def critic_forward(state, action, params, *, block_b=1024):
    """Returns (q1, q2), each of shape (B, 1), float32."""
    B, state_dim = state.shape
    action_dim = action.shape[1]
    ws, wa, b14, w2, b2, w5, b5, w36, b36 = params
    hidden = w2.shape[0]

    # Batch tile: multiple of 8 sublanes, capped at ceil(B/2) so the parallel
    # grid has >= 2 steps whenever B allows it (uses both v7x TensorCores).
    tb = min(block_b, _round_up(pl.cdiv(B, 2), 8))
    grid = (pl.cdiv(B, tb),)

    d_in = state_dim + action_dim
    flops = 2 * B * (d_in * 2 * hidden + 2 * hidden * hidden + 2 * hidden)
    param_bytes = sum(int(p.size) * p.dtype.itemsize for p in params)
    bytes_accessed = param_bytes + B * (d_in + 2) * 4

    def resident(shape):
        # Weights/biases stay VMEM-resident across all batch tiles; their
        # index_map is constant, so a single buffer is enough.
        return pl.BlockSpec(shape, lambda i: (0, 0),
                            pipeline_mode=pl.Buffered(1))

    out = pl.pallas_call(
        critic_kernel,
        out_shape=jax.ShapeDtypeStruct((B, 2), jnp.float32),
        grid=grid,
        in_specs=[
            pl.BlockSpec((tb, state_dim), lambda i: (i, 0)),
            pl.BlockSpec((tb, action_dim), lambda i: (i, 0)),
            resident(ws.shape),
            resident(wa.shape),
            resident(b14.shape),
            resident(w2.shape),
            resident(b2.shape),
            resident(w5.shape),
            resident(b5.shape),
            resident(w36.shape),
            resident(b36.shape),
        ],
        out_specs=pl.BlockSpec((tb, 2), lambda i: (i, 0)),
        compiler_params=pltpu.CompilerParams(
            dimension_semantics=("parallel",),
            vmem_limit_bytes=32 * 1024 * 1024,
        ),
        cost_estimate=pl.CostEstimate(
            flops=flops, transcendentals=0, bytes_accessed=bytes_accessed),
    )(state, action, ws, wa, b14, w2, b2, w5, b5, w36, b36)

    return out[:, 0:1], out[:, 1:2]


def init_params(key, state_dim, action_dim, hidden=256):
    """Synthetic init matching nn.Linear shapes, in x @ W + b (in, out) layout."""
    d_in = state_dim + action_dim
    keys = jax.random.split(key, 12)

    def lin(kw, kb, fan_in, fan_out):
        bound = 1.0 / float(jnp.sqrt(fan_in))
        w = jax.random.uniform(kw, (fan_in, fan_out), jnp.float32, -bound, bound)
        b = jax.random.uniform(kb, (1, fan_out), jnp.float32, -bound, bound)
        return w, b

    w1, b1 = lin(keys[0], keys[1], d_in, hidden)
    w2, b2 = lin(keys[2], keys[3], hidden, hidden)
    w3, b3 = lin(keys[4], keys[5], hidden, 1)
    w4, b4 = lin(keys[6], keys[7], d_in, hidden)
    w5, b5 = lin(keys[8], keys[9], hidden, hidden)
    w6, b6 = lin(keys[10], keys[11], hidden, 1)
    return (w1, b1, w2, b2, w3, b3, w4, b4, w5, b5, w6, b6)


def fuse_params(raw, state_dim):
    """Repack per-layer params into the fused kernel layout.

    Matmul weights (layers 1/2/4/5) are stored in bf16 (kernel accumulates in
    f32); biases and the 256->1 tail weights stay in f32.
    """
    (w1, b1, w2, b2, w3, b3, w4, b4, w5, b5, w6, b6) = raw
    w14 = jnp.concatenate([w1, w4], axis=1)                 # (d_in, 2H): fused layer 1
    ws = w14[:state_dim].astype(jnp.bfloat16)               # (state_dim, 2H)
    wa = w14[state_dim:].astype(jnp.bfloat16)               # (action_dim, 2H)
    b14 = jnp.concatenate([b1, b4], axis=1)                 # (1, 2H) f32
    w36 = jnp.concatenate([w3.T, w6.T], axis=0)             # (2, H) f32 tail rows
    b36 = jnp.concatenate([b3, b6], axis=1)                 # (1, 2) f32
    return (ws, wa, b14,
            w2.astype(jnp.bfloat16), b2,
            w5.astype(jnp.bfloat16), b5,
            w36, b36)


def reference_forward(state, action, raw):
    (w1, b1, w2, b2, w3, b3, w4, b4, w5, b5, w6, b6) = raw
    sa = jnp.concatenate([state, action], axis=-1)
    h = jnp.maximum(sa @ w1 + b1, 0.0)
    h = jnp.maximum(h @ w2 + b2, 0.0)
    q1 = h @ w3 + b3
    g = jnp.maximum(sa @ w4 + b4, 0.0)
    g = jnp.maximum(g @ w5 + b5, 0.0)
    q2 = g @ w6 + b6
    return q1, q2


if __name__ == "__main__":
    key = jax.random.PRNGKey(0)
    k_state, k_action, k_params = jax.random.split(key, 3)

    B, state_dim, action_dim = 8, 8, 4
    state = jax.random.normal(k_state, (B, state_dim), jnp.float32)
    action = jax.random.normal(k_action, (B, action_dim), jnp.float32)

    raw = init_params(k_params, state_dim, action_dim)
    fused = fuse_params(raw, state_dim)

    q1, q2 = critic_forward(state, action, fused)
    q1 = jax.block_until_ready(q1)
    q2 = jax.block_until_ready(q2)

    q1_ref, q2_ref = reference_forward(state, action, raw)
    assert q1.shape == (B, 1) and q2.shape == (B, 1)
    # bf16 MXU operands with f32 accumulation => loosened tolerance vs f32 ref.
    assert jnp.allclose(q1, q1_ref, atol=5e-2, rtol=5e-2), (
        "q1 max abs err", float(jnp.max(jnp.abs(q1 - q1_ref))))
    assert jnp.allclose(q2, q2_ref, atol=5e-2, rtol=5e-2), (
        "q2 max abs err", float(jnp.max(jnp.abs(q2 - q2_ref))))

    print("KERNEL_OK")
</pallas_src>

<mosaic_0001>
module attributes {stable_mosaic.version = 11 : i64} {
  func.func @critic_kernel(%arg0: i32, %arg1: memref<8x8xf32, #tpu.memory_space<vmem>>, %arg2: memref<8x4xf32, #tpu.memory_space<vmem>>, %arg3: memref<8x512xbf16, #tpu.memory_space<vmem>>, %arg4: memref<4x512xbf16, #tpu.memory_space<vmem>>, %arg5: memref<1x512xf32, #tpu.memory_space<vmem>>, %arg6: memref<256x256xbf16, #tpu.memory_space<vmem>>, %arg7: memref<1x256xf32, #tpu.memory_space<vmem>>, %arg8: memref<256x256xbf16, #tpu.memory_space<vmem>>, %arg9: memref<1x256xf32, #tpu.memory_space<vmem>>, %arg10: memref<2x256xf32, #tpu.memory_space<vmem>>, %arg11: memref<1x2xf32, #tpu.memory_space<vmem>>, %arg12: memref<8x2xf32, #tpu.memory_space<vmem>>) attributes {dimension_semantics = [#tpu.dimension_semantics<parallel>], iteration_bounds = array<i64: 1>, scalar_prefetch = 0 : i64, scratch_operands = 0 : i64, tpu.core_type = #tpu.core_type<tc>, window_params = [{transform_indices = @transform_0, window_bounds = array<i64: 8, 8>}, {transform_indices = @transform_1, window_bounds = array<i64: 8, 4>}, {pipeline_mode = #tpu.pipeline_mode<synchronous>, transform_indices = @transform_2, window_bounds = array<i64: 8, 512>}, {pipeline_mode = #tpu.pipeline_mode<synchronous>, transform_indices = @transform_3, window_bounds = array<i64: 4, 512>}, {pipeline_mode = #tpu.pipeline_mode<synchronous>, transform_indices = @transform_4, window_bounds = array<i64: 1, 512>}, {pipeline_mode = #tpu.pipeline_mode<synchronous>, transform_indices = @transform_5, window_bounds = array<i64: 256, 256>}, {pipeline_mode = #tpu.pipeline_mode<synchronous>, transform_indices = @transform_6, window_bounds = array<i64: 1, 256>}, {pipeline_mode = #tpu.pipeline_mode<synchronous>, transform_indices = @transform_7, window_bounds = array<i64: 256, 256>}, {pipeline_mode = #tpu.pipeline_mode<synchronous>, transform_indices = @transform_8, window_bounds = array<i64: 1, 256>}, {pipeline_mode = #tpu.pipeline_mode<synchronous>, transform_indices = @transform_9, window_bounds = array<i64: 2, 256>}, {pipeline_mode = #tpu.pipeline_mode<synchronous>, transform_indices = @transform_10, window_bounds = array<i64: 1, 2>}, {transform_indices = @transform_11, window_bounds = array<i64: 8, 2>}]} {
    %c0 = arith.constant 0 : index
    %c0_0 = arith.constant 0 : index
    %0 = vector.load %arg1[%c0, %c0_0] : memref<8x8xf32, #tpu.memory_space<vmem>>, vector<8x8xf32>
    %1 = arith.truncf %0 : vector<8x8xf32> to vector<8x8xbf16>
    %c0_1 = arith.constant 0 : index
    %c0_2 = arith.constant 0 : index
    %2 = vector.load %arg2[%c0_1, %c0_2] : memref<8x4xf32, #tpu.memory_space<vmem>>, vector<8x4xf32>
    %3 = arith.truncf %2 : vector<8x4xf32> to vector<8x4xbf16>
    %c0_3 = arith.constant 0 : index
    %c0_4 = arith.constant 0 : index
    %4 = vector.load %arg3[%c0_3, %c0_4] : memref<8x512xbf16, #tpu.memory_space<vmem>>, vector<8x512xbf16>
    %cst = arith.constant dense<0.000000e+00> : vector<8x512xf32>
    %5 = tpu.matmul %1, %4, %cst {dimension_numbers = #tpu.dot_dimension_numbers<[1], [0], [0], [1], [0, 0, 1, 1], [], []>} : vector<8x8xbf16>, vector<8x512xbf16>, vector<8x512xf32> -> vector<8x512xf32>
    %c0_5 = arith.constant 0 : index
    %c0_6 = arith.constant 0 : index
    %6 = vector.load %arg4[%c0_5, %c0_6] : memref<4x512xbf16, #tpu.memory_space<vmem>>, vector<4x512xbf16>
    %cst_7 = arith.constant dense<0.000000e+00> : vector<8x512xf32>
    %7 = tpu.matmul %3, %6, %cst_7 {dimension_numbers = #tpu.dot_dimension_numbers<[1], [0], [0], [1], [0, 0, 1, 1], [], []>} : vector<8x4xbf16>, vector<4x512xbf16>, vector<8x512xf32> -> vector<8x512xf32>
    %8 = arith.addf %5, %7 : vector<8x512xf32>
    %c0_8 = arith.constant 0 : index
    %c0_9 = arith.constant 0 : index
    %9 = vector.load %arg5[%c0_8, %c0_9] : memref<1x512xf32, #tpu.memory_space<vmem>>, vector<1x512xf32>
    %10 = vector.broadcast %9 : vector<1x512xf32> to vector<8x512xf32>
    %11 = arith.addf %8, %10 : vector<8x512xf32>
    %cst_10 = arith.constant 0.000000e+00 : f32
    %12 = vector.broadcast %cst_10 : f32 to vector<8x512xf32>
    %13 = arith.maximumf %11, %12 : vector<8x512xf32>
    %14 = vector.extract_strided_slice %13 {offsets = [0, 0], sizes = [8, 256], strides = [1, 1]} : vector<8x512xf32> to vector<8x256xf32>
    %15 = vector.extract_strided_slice %13 {offsets = [0, 256], sizes = [8, 256], strides = [1, 1]} : vector<8x512xf32> to vector<8x256xf32>
    %16 = arith.truncf %14 : vector<8x256xf32> to vector<8x256xbf16>
    %c0_11 = arith.constant 0 : index
    %c0_12 = arith.constant 0 : index
    %17 = vector.load %arg6[%c0_11, %c0_12] : memref<256x256xbf16, #tpu.memory_space<vmem>>, vector<256x256xbf16>
    %cst_13 = arith.constant dense<0.000000e+00> : vector<8x256xf32>
    %18 = tpu.matmul %16, %17, %cst_13 {dimension_numbers = #tpu.dot_dimension_numbers<[1], [0], [0], [1], [0, 0, 1, 1], [], []>} : vector<8x256xbf16>, vector<256x256xbf16>, vector<8x256xf32> -> vector<8x256xf32>
    %c0_14 = arith.constant 0 : index
    %c0_15 = arith.constant 0 : index
    %19 = vector.load %arg7[%c0_14, %c0_15] : memref<1x256xf32, #tpu.memory_space<vmem>>, vector<1x256xf32>
    %20 = vector.broadcast %19 : vector<1x256xf32> to vector<8x256xf32>
    %21 = arith.addf %18, %20 : vector<8x256xf32>
    %cst_16 = arith.constant 0.000000e+00 : f32
    %22 = vector.broadcast %cst_16 : f32 to vector<8x256xf32>
    %23 = arith.maximumf %21, %22 : vector<8x256xf32>
    %24 = arith.truncf %15 : vector<8x256xf32> to vector<8x256xbf16>
    %c0_17 = arith.constant 0 : index
    %c0_18 = arith.constant 0 : index
    %25 = vector.load %arg8[%c0_17, %c0_18] : memref<256x256xbf16, #tpu.memory_space<vmem>>, vector<256x256xbf16>
    %cst_19 = arith.constant dense<0.000000e+00> : vector<8x256xf32>
    %26 = tpu.matmul %24, %25, %cst_19 {dimension_numbers = #tpu.dot_dimension_numbers<[1], [0], [0], [1], [0, 0, 1, 1], [], []>} : vector<8x256xbf16>, vector<256x256xbf16>, vector<8x256xf32> -> vector<8x256xf32>
    %c0_20 = arith.constant 0 : index
    %c0_21 = arith.constant 0 : index
    %27 = vector.load %arg9[%c0_20, %c0_21] : memref<1x256xf32, #tpu.memory_space<vmem>>, vector<1x256xf32>
    %28 = vector.broadcast %27 : vector<1x256xf32> to vector<8x256xf32>
    %29 = arith.addf %26, %28 : vector<8x256xf32>
    %cst_22 = arith.constant 0.000000e+00 : f32
    %30 = vector.broadcast %cst_22 : f32 to vector<8x256xf32>
    %31 = arith.maximumf %29, %30 : vector<8x256xf32>
    %c0_23 = arith.constant 0 : index
    %c0_24 = arith.constant 0 : index
    %32 = vector.load %arg10[%c0_23, %c0_24] : memref<2x256xf32, #tpu.memory_space<vmem>>, vector<1x256xf32>
    %33 = vector.broadcast %32 : vector<1x256xf32> to vector<8x256xf32>
    %34 = arith.mulf %23, %33 : vector<8x256xf32>
    %cst_25 = arith.constant dense<0.000000e+00> : vector<8xf32>
    %35 = vector.multi_reduction <add>, %34, %cst_25 [1] : vector<8x256xf32> to vector<8xf32>
    %36 = vector.shape_cast %35 : vector<8xf32> to vector<8x1xf32>
    %c1 = arith.constant 1 : index
    %c0_26 = arith.constant 0 : index
    %37 = vector.load %arg10[%c1, %c0_26] : memref<2x256xf32, #tpu.memory_space<vmem>>, vector<1x256xf32>
    %38 = vector.broadcast %37 : vector<1x256xf32> to vector<8x256xf32>
    %39 = arith.mulf %31, %38 : vector<8x256xf32>
    %cst_27 = arith.constant dense<0.000000e+00> : vector<8xf32>
    %40 = vector.multi_reduction <add>, %39, %cst_27 [1] : vector<8x256xf32> to vector<8xf32>
    %41 = vector.shape_cast %40 : vector<8xf32> to vector<8x1xf32>
    %42 = tpu.iota {dimensions = array<i32: 1>} : vector<8x2xi32>
    %c0_i32 = arith.constant 0 : i32
    %43 = vector.broadcast %c0_i32 : i32 to vector<8x2xi32>
    %44 = arith.cmpi eq, %42, %43 : vector<8x2xi32>
    %45 = vector.shape_cast %36 : vector<8x1xf32> to vector<8x1xf32>
    %46 = vector.broadcast %45 : vector<8x1xf32> to vector<8x2xf32>
    %47 = vector.shape_cast %41 : vector<8x1xf32> to vector<8x1xf32>
    %48 = vector.broadcast %47 : vector<8x1xf32> to vector<8x2xf32>
    %49 = arith.select %44, %46, %48 : vector<8x2xi1>, vector<8x2xf32>
    %c0_28 = arith.constant 0 : index
    %c0_29 = arith.constant 0 : index
    %50 = vector.load %arg11[%c0_28, %c0_29] : memref<1x2xf32, #tpu.memory_space<vmem>>, vector<1x2xf32>
    %51 = vector.broadcast %50 : vector<1x2xf32> to vector<8x2xf32>
    %52 = arith.addf %49, %51 : vector<8x2xf32>
    %c0_30 = arith.constant 0 : index
    %c0_31 = arith.constant 0 : index
    %53 = vector.load %arg12[%c0_30, %c0_31] : memref<8x2xf32, #tpu.memory_space<vmem>>, vector<8x2xf32>
    tpu.vector_store %arg12[%c0_30, %c0_31], %52 {strides = array<i32>} : memref<8x2xf32, #tpu.memory_space<vmem>>, vector<8x2xf32>,
    return
  }
  func.func @transform_0(%arg0: i32) -> (i32, i32) {
    %c0_i32 = arith.constant 0 : i32
    %c0_i32_0 = arith.constant 0 : i32
    return %arg0, %c0_i32 : i32, i32
  }
  func.func @transform_1(%arg0: i32) -> (i32, i32) {
    %c0_i32 = arith.constant 0 : i32
    %c0_i32_0 = arith.constant 0 : i32
    return %arg0, %c0_i32 : i32, i32
  }
  func.func @transform_2(%arg0: i32) -> (i32, i32) {
    %c0_i32 = arith.constant 0 : i32
    %c0_i32_0 = arith.constant 0 : i32
    %c0_i32_1 = arith.constant 0 : i32
    return %c0_i32, %c0_i32_0 : i32, i32
  }
  func.func @transform_3(%arg0: i32) -> (i32, i32) {
    %c0_i32 = arith.constant 0 : i32
    %c0_i32_0 = arith.constant 0 : i32
    %c0_i32_1 = arith.constant 0 : i32
    return %c0_i32, %c0_i32_0 : i32, i32
  }
  func.func @transform_4(%arg0: i32) -> (i32, i32) {
    %c0_i32 = arith.constant 0 : i32
    %c0_i32_0 = arith.constant 0 : i32
    %c0_i32_1 = arith.constant 0 : i32
    return %c0_i32, %c0_i32_0 : i32, i32
  }
  func.func @transform_5(%arg0: i32) -> (i32, i32) {
    %c0_i32 = arith.constant 0 : i32
    %c0_i32_0 = arith.constant 0 : i32
    %c0_i32_1 = arith.constant 0 : i32
    return %c0_i32, %c0_i32_0 : i32, i32
  }
  func.func @transform_6(%arg0: i32) -> (i32, i32) {
    %c0_i32 = arith.constant 0 : i32
    %c0_i32_0 = arith.constant 0 : i32
    %c0_i32_1 = arith.constant 0 : i32
    return %c0_i32, %c0_i32_0 : i32, i32
  }
  func.func @transform_7(%arg0: i32) -> (i32, i32) {
    %c0_i32 = arith.constant 0 : i32
    %c0_i32_0 = arith.constant 0 : i32
    %c0_i32_1 = arith.constant 0 : i32
    return %c0_i32, %c0_i32_0 : i32, i32
  }
  func.func @transform_8(%arg0: i32) -> (i32, i32) {
    %c0_i32 = arith.constant 0 : i32
    %c0_i32_0 = arith.constant 0 : i32
    %c0_i32_1 = arith.constant 0 : i32
    return %c0_i32, %c0_i32_0 : i32, i32
  }
  func.func @transform_9(%arg0: i32) -> (i32, i32) {
    %c0_i32 = arith.constant 0 : i32
    %c0_i32_0 = arith.constant 0 : i32
    %c0_i32_1 = arith.constant 0 : i32
    return %c0_i32, %c0_i32_0 : i32, i32
  }
  func.func @transform_10(%arg0: i32) -> (i32, i32) {
    %c0_i32 = arith.constant 0 : i32
    %c0_i32_0 = arith.constant 0 : i32
    %c0_i32_1 = arith.constant 0 : i32
    return %c0_i32, %c0_i32_0 : i32, i32
  }
  func.func @transform_11(%arg0: i32) -> (i32, i32) {
    %c0_i32 = arith.constant 0 : i32
    %c0_i32_0 = arith.constant 0 : i32
    return %arg0, %c0_i32 : i32, i32
  }
}

</mosaic_0001>

<llo_original>
// kernel: tpu_custom_call.1
$region0: #{tpu_custom_call.1}
  #allocation0 [shape = 'u32[]', space=smem, size = 0x4, offset = 0x4, fixed_abs, tag = 'smem constant byte address 0x4 - core index']
  #allocation1 [shape = 'u32[144,128]{1,0:T(1,128)}', space=vmem, size = 0x12000, scoped, tag = 'internal scratch']
  %s0 = inlined_call_operand.hbm [shape: f32[8,8], index: 0, kind: input, shape index: {}]
  %s1 = inlined_call_operand.vmem [shape: f32[8,4], index: 1, kind: input, shape index: {}]
  %s2 = inlined_call_operand.vmem [shape: bf16[8,512], index: 2, kind: input, shape index: {}]
  %s3 = inlined_call_operand.hbm [shape: bf16[4,512], index: 3, kind: input, shape index: {}]
  %s4 = inlined_call_operand.vmem [shape: f32[1,512], index: 4, kind: input, shape index: {}]
  %s5 = inlined_call_operand.hbm [shape: bf16[256,256], index: 5, kind: input, shape index: {}]
  %s6 = inlined_call_operand.vmem [shape: f32[1,256], index: 6, kind: input, shape index: {}]
  %s7 = inlined_call_operand.hbm [shape: bf16[256,256], index: 7, kind: input, shape index: {}]
  %s8 = inlined_call_operand.vmem [shape: f32[1,256], index: 8, kind: input, shape index: {}]
  %s9 = inlined_call_operand.vmem [shape: f32[2,256], index: 9, kind: input, shape index: {}]
  %s10 = inlined_call_operand.vmem [shape: f32[1,2], index: 10, kind: input, shape index: {}]
  %s11 = inlined_call_operand.vmem [shape: f32[8,2], index: 11, kind: output, shape index: {}]
  %s12 = sld [smem:[#allocation0]]
  $region70: #{tpu_custom_call.1} parent=0
    _
  %s14 = ssub.s32 1, %s12
  %s15 = scalar_select 0, %s14, %s12
  $region1: #{tpu_custom_call.1} parent=0
    #allocation2 [shape = 'u8[4096]{0}', space=vmem, size = 0x1000, scoped, tag = 'input window, operand 0, single buffered']
    #allocation3 [shape = 's32[1]{0}', space=sflag, size = 0x4, scoped, tag = 'scoped memory for tpu_custom_call.1']
    #allocation4 [shape = 'u8[4096]{0}', space=vmem, size = 0x1000, scoped, tag = 'input window, operand 3, single buffered']
    #allocation5 [shape = 's32[1]{0}', space=sflag, size = 0x4, scoped, tag = 'scoped memory for tpu_custom_call.1']
    #allocation6 [shape = 'u8[131072]{0}', space=vmem, size = 0x20000, scoped, tag = 'input window, operand 5, single buffered']
    #allocation7 [shape = 'u8[131072]{0}', space=vmem, size = 0x20000, scoped, tag = 'input window, operand 7, single buffered']
    #allocation8 [shape = 's32[1]{0}', space=sflag, size = 0x4, scoped, tag = 'scoped memory for tpu_custom_call.1']
    %16 = vsyncpa [#allocation3], 0
    %17 = vsyncpa [#allocation5], 0
    %18 = vsyncpa [#allocation8], 0
    // Predicated region
    $region2: #{tpu_custom_call.1} parent=1 // pred_check
      _
    $region3: #{tpu_custom_call.1} parent=1 // pred_check_branch
      %20 = sbr.rel (0) target = $region5
    $region4: #{tpu_custom_call.1} parent=1 // pred_region
      %s22 = ssub.s32 128, 128
      %23 = vsyncadd [#allocation3], %s22
      %s25 = sshll.u32 [#allocation2], 4
      %s26 = int_to_ptr.vmem [resolvable:$true] %s25
      %28 = dma.hbm_to_vmem [thread:$0]  %s0, 128, %s26, [#allocation3]
    $region5: #{tpu_custom_call.1} parent=1 // pred_fallthru
      _
    // Predicated region
    $region6: #{tpu_custom_call.1} parent=1 // pred_check
      _
    $region7: #{tpu_custom_call.1} parent=1 // pred_check_branch
      %30 = sbr.rel (0) target = $region9
    $region8: #{tpu_custom_call.1} parent=1 // pred_region
      _
    $region9: #{tpu_custom_call.1} parent=1 // pred_fallthru
      _
    // Predicated region
    $region10: #{tpu_custom_call.1} parent=1 // pred_check
      _
    $region11: #{tpu_custom_call.1} parent=1 // pred_check_branch
      %32 = sbr.rel (0) target = $region13
    $region12: #{tpu_custom_call.1} parent=1 // pred_region
      _
    $region13: #{tpu_custom_call.1} parent=1 // pred_fallthru
      _
    // Predicated region
    $region14: #{tpu_custom_call.1} parent=1 // pred_check
      _
    $region15: #{tpu_custom_call.1} parent=1 // pred_check_branch
      %34 = sbr.rel (0) target = $region17
    $region16: #{tpu_custom_call.1} parent=1 // pred_region
      %s36 = ssub.s32 128, 128
      %37 = vsyncadd [#allocation5], %s36
      %s39 = sshll.u32 [#allocation4], 4
      %s40 = int_to_ptr.vmem [resolvable:$true] %s39
      %42 = dma.hbm_to_vmem [thread:$0]  %s3, 128, %s40, [#allocation5]
    $region17: #{tpu_custom_call.1} parent=1 // pred_fallthru
      _
    // Predicated region
    $region18: #{tpu_custom_call.1} parent=1 // pred_check
      _
    $region19: #{tpu_custom_call.1} parent=1 // pred_check_branch
      %44 = sbr.rel (0) target = $region21
    $region20: #{tpu_custom_call.1} parent=1 // pred_region
      _
    $region21: #{tpu_custom_call.1} parent=1 // pred_fallthru
      _
    // Predicated region
    $region22: #{tpu_custom_call.1} parent=1 // pred_check
      _
    $region23: #{tpu_custom_call.1} parent=1 // pred_check_branch
      %46 = sbr.rel (0) target = $region25
    $region24: #{tpu_custom_call.1} parent=1 // pred_region
      %s48 = ssub.s32 4096, 4096
      %49 = vsyncadd [#allocation5], %s48
      %s50 = sshll.u32 [#allocation6], 4
      %s51 = int_to_ptr.vmem [resolvable:$true] %s50
      %56 = dma.hbm_to_vmem [thread:$0]  %s5, 4096, %s51, [#allocation5], 128, 128, 8
    $region25: #{tpu_custom_call.1} parent=1 // pred_fallthru
      _
    // Predicated region
    $region26: #{tpu_custom_call.1} parent=1 // pred_check
      _
    $region27: #{tpu_custom_call.1} parent=1 // pred_check_branch
      %58 = sbr.rel (0) target = $region29
    $region28: #{tpu_custom_call.1} parent=1 // pred_region
      _
    $region29: #{tpu_custom_call.1} parent=1 // pred_fallthru
      _
    // Predicated region
    $region30: #{tpu_custom_call.1} parent=1 // pred_check
      _
    $region31: #{tpu_custom_call.1} parent=1 // pred_check_branch
      %60 = sbr.rel (0) target = $region33
    $region32: #{tpu_custom_call.1} parent=1 // pred_region
      %s62 = ssub.s32 4096, 4096
      %63 = vsyncadd [#allocation8], %s62
      %s64 = sshll.u32 [#allocation7], 4
      %s65 = int_to_ptr.vmem [resolvable:$true] %s64
      %70 = dma.hbm_to_vmem [thread:$0]  %s7, 4096, %s65, [#allocation8], 128, 128, 8
    $region33: #{tpu_custom_call.1} parent=1 // pred_fallthru
      _
    // Predicated region
    $region34: #{tpu_custom_call.1} parent=1 // pred_check
      _
    $region35: #{tpu_custom_call.1} parent=1 // pred_check_branch
      %72 = sbr.rel (0) target = $region37
    $region36: #{tpu_custom_call.1} parent=1 // pred_region
      _
    $region37: #{tpu_custom_call.1} parent=1 // pred_fallthru
      _
    // Predicated region
    $region38: #{tpu_custom_call.1} parent=1 // pred_check
      _
    $region39: #{tpu_custom_call.1} parent=1 // pred_check_branch
      %74 = sbr.rel (0) target = $region41
    $region40: #{tpu_custom_call.1} parent=1 // pred_region
      _
    $region41: #{tpu_custom_call.1} parent=1 // pred_fallthru
      _
    // Predicated region
    $region42: #{tpu_custom_call.1} parent=1 // pred_check
      _
    $region43: #{tpu_custom_call.1} parent=1 // pred_check_branch
      %76 = sbr.rel (0) target = $region45
    $region44: #{tpu_custom_call.1} parent=1 // pred_region
      _
    $region45: #{tpu_custom_call.1} parent=1 // pred_fallthru
      _
    // Predicated region
    $region46: #{tpu_custom_call.1} parent=1 // pred_check
      _
    $region47: #{tpu_custom_call.1} parent=1 // pred_check_branch
      %78 = sbr.rel (0) target = $region49
    $region48: #{tpu_custom_call.1} parent=1 // pred_region
      %79 = dma.done [#allocation3], 128
    $region49: #{tpu_custom_call.1} parent=1 // pred_fallthru
      _
    // Predicated region
    $region50: #{tpu_custom_call.1} parent=1 // pred_check
      _
    $region51: #{tpu_custom_call.1} parent=1 // pred_check_branch
      %81 = sbr.rel (0) target = $region53
    $region52: #{tpu_custom_call.1} parent=1 // pred_region
      %82 = dma.done [#allocation5], 128
    $region53: #{tpu_custom_call.1} parent=1 // pred_fallthru
      _
    // Predicated region
    $region54: #{tpu_custom_call.1} parent=1 // pred_check
      _
    $region55: #{tpu_custom_call.1} parent=1 // pred_check_branch
      %84 = sbr.rel (0) target = $region57
    $region56: #{tpu_custom_call.1} parent=1 // pred_region
      %85 = dma.done [#allocation5], 4096
    $region57: #{tpu_custom_call.1} parent=1 // pred_fallthru
      _
    // Predicated region
    $region58: #{tpu_custom_call.1} parent=1 // pred_check
      _
    $region59: #{tpu_custom_call.1} parent=1 // pred_check_branch
      %87 = sbr.rel (0) target = $region61
    $region60: #{tpu_custom_call.1} parent=1 // pred_region
      %88 = dma.done [#allocation8], 4096
    $region61: #{tpu_custom_call.1} parent=1 // pred_fallthru
      _
    %v90 = vld [vmem:[#allocation2] sm:$0xff]
    %v91 = vpack.c.bf16 %v90, %v90
    %v92 = vld [vmem:[%s1] sm:$0xff]
    %v93 = vpack.c.bf16 %v92, %v92
    %v94 = vld [vmem:[%s2] sm:$0xff]
    %v95 = vld [vmem:[%s2 + $0x8] sm:$0xff]
    %v96 = vld [vmem:[#allocation4] sm:$0xff]
    %v98 = vcombine.high %v96, %v96
    %v100 = vunpack.c.l.s4 1983009808
    %v101 = vunpack.c.0.s8 %v100
    %v102 = vlaneseq
    %v103 = vshrl.u32 %v102, 7
    %v104 = vsub.s32 %v101, %v103
    %v105 = vrot.slane %v96, %v104
    %v107 = vunpack.c.l.s4 1983009808
    %v108 = vunpack.c.0.s8 %v107
    %v109 = vlaneseq
    %v110 = vshrl.u32 %v109, 7
    %v111 = vsub.s32 %v108, %v110
    %v112 = vrot.slane %v98, %v111
    %v113 = vcombine.high %v105, %v105
    %v114 = vcombine.high %v112, %v112
    %vm115 = vcmask 31744
    %v117 = vsel %vm115, %v93, 0
    %vm119 = vcmask 1041408
    %v121 = vsel %vm119, %v105, 0
    %v124 = vsel %vm119, %v113, 0
    %v127 = vsel %vm119, %v112, 0
    %v130 = vsel %vm119, %v114, 0
    %132 = vmatprep.subr.bf16.mxu0 %v124
    %133 = vmatpush1.bf16.msra.mxu0 %v121
    %134 = vmatprep.subr.bf16.mxu0 0
    %135 = vmatpush1.bf16.msra.mxu0 0
    %136 = vmatprep.subr.bf16.mxu0 0
    %137 = vmatpush1.bf16.msra.mxu0 0
    %138 = vmatprep.subr.bf16.mxu0 0
    %139 = vmatpush1.bf16.msra.mxu0 0
    %140 = vmatprep.subr.bf16.mxu0 0
    %141 = vmatpush1.bf16.msra.mxu0 0
    %142 = vmatprep.subr.bf16.mxu0 0
    %143 = vmatpush1.bf16.msra.mxu0 0
    %144 = vmatprep.subr.bf16.mxu0 0
    %145 = vmatpush1.bf16.msra.mxu0 0
    %146 = vmatprep.subr.bf16.mxu0 0
    %147 = vmatpush1.bf16.msra.mxu0 0
    %148 = vmatprep.subr.bf16.mxu0 0
    %149 = vmatpush1.bf16.msra.mxu0 0
    %150 = vmatprep.subr.bf16.mxu0 0
    %151 = vmatpush1.bf16.msra.mxu0 0
    %152 = vmatprep.subr.bf16.mxu0 0
    %153 = vmatpush1.bf16.msra.mxu0 0
    %154 = vmatprep.subr.bf16.mxu0 0
    %155 = vmatpush1.bf16.msra.mxu0 0
    %156 = vmatprep.subr.bf16.mxu0 0
    %157 = vmatpush1.bf16.msra.mxu0 0
    %158 = vmatprep.subr.bf16.mxu0 0
    %159 = vmatpush1.bf16.msra.mxu0 0
    %160 = vmatprep.subr.bf16.mxu0 0
    %161 = vmatpush1.bf16.msra.mxu0 0
    %162 = vmatprep.subr.bf16.mxu0 0
    %163 = vmatpush1.bf16.msra.mxu0 0
    %164 = vmatprep.mubr.bf16.mxu0 0
    %165 = vmatmul.mubr.bf16.gmra.mrb[0].mxu0 %v117
    %v166 = vpop.f32.mrb[0].mxu0
    %v167 = vadd.f32 0.0, %v166
    %v168 = vpop.f32.mrb[0].mxu0
    %v169 = vadd.f32 0.0, %v168
    %v170 = vpop.f32.mrb[0].mxu0
    %v171 = vpop.f32.mrb[0].mxu0
    %172 = vdwg.mxu0
    %173 = vmatprep.subr.bf16.mxu0 %v130
    %174 = vmatpush1.bf16.msra.mxu0 %v127
    %175 = vmatprep.subr.bf16.mxu0 0
    %176 = vmatpush1.bf16.msra.mxu0 0
    %177 = vmatprep.subr.bf16.mxu0 0
    %178 = vmatpush1.bf16.msra.mxu0 0
    %179 = vmatprep.subr.bf16.mxu0 0
    %180 = vmatpush1.bf16.msra.mxu0 0
    %181 = vmatprep.subr.bf16.mxu0 0
    %182 = vmatpush1.bf16.msra.mxu0 0
    %183 = vmatprep.subr.bf16.mxu0 0
    %184 = vmatpush1.bf16.msra.mxu0 0
    %185 = vmatprep.subr.bf16.mxu0 0
    %186 = vmatpush1.bf16.msra.mxu0 0
    %187 = vmatprep.subr.bf16.mxu0 0
    %188 = vmatpush1.bf16.msra.mxu0 0
    %189 = vmatprep.subr.bf16.mxu0 0
    %190 = vmatpush1.bf16.msra.mxu0 0
    %191 = vmatprep.subr.bf16.mxu0 0
    %192 = vmatpush1.bf16.msra.mxu0 0
    %193 = vmatprep.subr.bf16.mxu0 0
    %194 = vmatpush1.bf16.msra.mxu0 0
    %195 = vmatprep.subr.bf16.mxu0 0
    %196 = vmatpush1.bf16.msra.mxu0 0
    %197 = vmatprep.subr.bf16.mxu0 0
    %198 = vmatpush1.bf16.msra.mxu0 0
    %199 = vmatprep.subr.bf16.mxu0 0
    %200 = vmatpush1.bf16.msra.mxu0 0
    %201 = vmatprep.subr.bf16.mxu0 0
    %202 = vmatpush1.bf16.msra.mxu0 0
    %203 = vmatprep.subr.bf16.mxu0 0
    %204 = vmatpush1.bf16.msra.mxu0 0
    %205 = vmatprep.mubr.bf16.mxu0 0
    %206 = vmatmul.mubr.bf16.gmra.mrb[0].mxu0 %v117
    %v207 = vpop.f32.mrb[0].mxu0
    %v208 = vadd.f32 0.0, %v207
    %v209 = vpop.f32.mrb[0].mxu0
    %v210 = vadd.f32 0.0, %v209
    %v211 = vpop.f32.mrb[0].mxu0
    %v212 = vpop.f32.mrb[0].mxu0
    %213 = vdwg.mxu0
    %v216 = vunpack.c.l.b16 %v94
    %v217 = vunpack.c.h.b16 %v94
    %v218 = vunpack.c.l.b16 %v95
    %v219 = vunpack.c.h.b16 %v95
    %v220 = vpack.c.b16 %v216, %v216
    %v221 = vpack.c.b16 %v217, %v217
    %v222 = vpack.c.b16 %v218, %v218
    %v223 = vpack.c.b16 %v219, %v219
    %vm224 = vcmask 64512
    %v226 = vsel %vm224, %v91, 0
    %vm228 = vcmask 1043456
    %v230 = vsel %vm228, %v220, 0
    %v233 = vsel %vm228, %v221, 0
    %v236 = vsel %vm228, %v222, 0
    %v239 = vsel %vm228, %v223, 0
    %241 = vmatprep.subr.bf16.mxu0 %v233
    %242 = vmatpush1.bf16.msra.mxu0 %v230
    %243 = vmatprep.subr.bf16.mxu0 0
    %244 = vmatpush1.bf16.msra.mxu0 0
    %245 = vmatprep.subr.bf16.mxu0 0
    %246 = vmatpush1.bf16.msra.mxu0 0
    %247 = vmatprep.subr.bf16.mxu0 0
    %248 = vmatpush1.bf16.msra.mxu0 0
    %249 = vmatprep.subr.bf16.mxu0 0
    %250 = vmatpush1.bf16.msra.mxu0 0
    %251 = vmatprep.subr.bf16.mxu0 0
    %252 = vmatpush1.bf16.msra.mxu0 0
    %253 = vmatprep.subr.bf16.mxu0 0
    %254 = vmatpush1.bf16.msra.mxu0 0
    %255 = vmatprep.subr.bf16.mxu0 0
    %256 = vmatpush1.bf16.msra.mxu0 0
    %257 = vmatprep.subr.bf16.mxu0 0
    %258 = vmatpush1.bf16.msra.mxu0 0
    %259 = vmatprep.subr.bf16.mxu0 0
    %260 = vmatpush1.bf16.msra.mxu0 0
    %261 = vmatprep.subr.bf16.mxu0 0
    %262 = vmatpush1.bf16.msra.mxu0 0
    %263 = vmatprep.subr.bf16.mxu0 0
    %264 = vmatpush1.bf16.msra.mxu0 0
    %265 = vmatprep.subr.bf16.mxu0 0
    %266 = vmatpush1.bf16.msra.mxu0 0
    %267 = vmatprep.subr.bf16.mxu0 0
    %268 = vmatpush1.bf16.msra.mxu0 0
    %269 = vmatprep.subr.bf16.mxu0 0
    %270 = vmatpush1.bf16.msra.mxu0 0
    %271 = vmatprep.subr.bf16.mxu0 0
    %272 = vmatpush1.bf16.msra.mxu0 0
    %273 = vmatprep.mubr.bf16.mxu0 0
    %274 = vmatmul.mubr.bf16.gmra.mrb[0].mxu0 %v226
    %v275 = vpop.f32.mrb[0].mxu0
    %v276 = vadd.f32 %v167, %v275
    %v277 = vpop.f32.mrb[0].mxu0
    %v278 = vadd.f32 %v169, %v277
    %v279 = vpop.f32.mrb[0].mxu0
    %v280 = vpop.f32.mrb[0].mxu0
    %281 = vdwg.mxu0
    %282 = vmatprep.subr.bf16.mxu0 %v239
    %283 = vmatpush1.bf16.msra.mxu0 %v236
    %284 = vmatprep.subr.bf16.mxu0 0
    %285 = vmatpush1.bf16.msra.mxu0 0
    %286 = vmatprep.subr.bf16.mxu0 0
    %287 = vmatpush1.bf16.msra.mxu0 0
    %288 = vmatprep.subr.bf16.mxu0 0
    %289 = vmatpush1.bf16.msra.mxu0 0
    %290 = vmatprep.subr.bf16.mxu0 0
    %291 = vmatpush1.bf16.msra.mxu0 0
    %292 = vmatprep.subr.bf16.mxu0 0
    %293 = vmatpush1.bf16.msra.mxu0 0
    %294 = vmatprep.subr.bf16.mxu0 0
    %295 = vmatpush1.bf16.msra.mxu0 0
    %296 = vmatprep.subr.bf16.mxu0 0
    %297 = vmatpush1.bf16.msra.mxu0 0
    %298 = vmatprep.subr.bf16.mxu0 0
    %299 = vmatpush1.bf16.msra.mxu0 0
    %300 = vmatprep.subr.bf16.mxu0 0
    %301 = vmatpush1.bf16.msra.mxu0 0
    %302 = vmatprep.subr.bf16.mxu0 0
    %303 = vmatpush1.bf16.msra.mxu0 0
    %304 = vmatprep.subr.bf16.mxu0 0
    %305 = vmatpush1.bf16.msra.mxu0 0
    %306 = vmatprep.subr.bf16.mxu0 0
    %307 = vmatpush1.bf16.msra.mxu0 0
    %308 = vmatprep.subr.bf16.mxu0 0
    %309 = vmatpush1.bf16.msra.mxu0 0
    %310 = vmatprep.subr.bf16.mxu0 0
    %311 = vmatpush1.bf16.msra.mxu0 0
    %312 = vmatprep.subr.bf16.mxu0 0
    %313 = vmatpush1.bf16.msra.mxu0 0
    %314 = vmatprep.mubr.bf16.mxu0 0
    %315 = vmatmul.mubr.bf16.gmra.mrb[0].mxu0 %v226
    %v316 = vpop.f32.mrb[0].mxu0
    %v317 = vadd.f32 %v208, %v316
    %v318 = vpop.f32.mrb[0].mxu0
    %v319 = vadd.f32 %v210, %v318
    %v320 = vpop.f32.mrb[0].mxu0
    %v321 = vpop.f32.mrb[0].mxu0
    %322 = vdwg.mxu0
    %v323 = vld [vmem:[%s4] sm:$0xf]
    %v325 = vlaneseq
    %v326 = vshrl.u32 %v325, 7
    %v327 = vsub.s32 0, %v326
    %v328 = vrot.slane %v323, %v327
    %v329 = vlaneseq
    %v330 = vshrl.u32 %v329, 7
    %v331 = vsub.s32 1, %v330
    %v332 = vrot.slane %v323, %v331
    %v333 = vlaneseq
    %v334 = vshrl.u32 %v333, 7
    %v335 = vsub.s32 2, %v334
    %v336 = vrot.slane %v323, %v335
    %v337 = vlaneseq
    %v338 = vshrl.u32 %v337, 7
    %v339 = vsub.s32 3, %v338
    %v340 = vrot.slane %v323, %v339
    %v345 = vadd.f32 %v276, %v328
    %v346 = vadd.f32 %v278, %v332
    %v347 = vadd.f32 %v317, %v336
    %v348 = vadd.f32 %v319, %v340
    %v349 = vmax.f32 %v345, 0.0
    %v350 = vmax.f32 %v346, 0.0
    %v351 = vmax.f32 %v347, 0.0
    %v352 = vmax.f32 %v348, 0.0
    %v353 = vpack.c.bf16 %v349, %v349
    %v354 = vpack.c.bf16 %v350, %v350
    %v355 = vld [vmem:[#allocation6] sm:$0xff]
    %v356 = vld [vmem:[#allocation6 + $0x8] sm:$0xff]
    %v357 = vld [vmem:[#allocation6 + $0x10] sm:$0xff]
    %v358 = vld [vmem:[#allocation6 + $0x18] sm:$0xff]
    %v359 = vld [vmem:[#allocation6 + $0x20] sm:$0xff]
    %v360 = vld [vmem:[#allocation6 + $0x28] sm:$0xff]
    %v361 = vld [vmem:[#allocation6 + $0x30] sm:$0xff]
    %v362 = vld [vmem:[#allocation6 + $0x38] sm:$0xff]
    %v363 = vld [vmem:[#allocation6 + $0x40] sm:$0xff]
    %v364 = vld [vmem:[#allocation6 + $0x48] sm:$0xff]
    %v365 = vld [vmem:[#allocation6 + $0x50] sm:$0xff]
    %v366 = vld [vmem:[#allocation6 + $0x58] sm:$0xff]
    %v367 = vld [vmem:[#allocation6 + $0x60] sm:$0xff]
    %v368 = vld [vmem:[#allocation6 + $0x68] sm:$0xff]
    %v369 = vld [vmem:[#allocation6 + $0x70] sm:$0xff]
    %v370 = vld [vmem:[#allocation6 + $0x78] sm:$0xff]
    %v371 = vld [vmem:[#allocation6 + $0x80] sm:$0xff]
    %v372 = vld [vmem:[#allocation6 + $0x88] sm:$0xff]
    %v373 = vld [vmem:[#allocation6 + $0x90] sm:$0xff]
    %v374 = vld [vmem:[#allocation6 + $0x98] sm:$0xff]
    %v375 = vld [vmem:[#allocation6 + $0xa0] sm:$0xff]
    %v376 = vld [vmem:[#allocation6 + $0xa8] sm:$0xff]
    %v377 = vld [vmem:[#allocation6 + $0xb0] sm:$0xff]
    %v378 = vld [vmem:[#allocation6 + $0xb8] sm:$0xff]
    %v379 = vld [vmem:[#allocation6 + $0xc0] sm:$0xff]
    %v380 = vld [vmem:[#allocation6 + $0xc8] sm:$0xff]
    %v381 = vld [vmem:[#allocation6 + $0xd0] sm:$0xff]
    %v382 = vld [vmem:[#allocation6 + $0xd8] sm:$0xff]
    %v383 = vld [vmem:[#allocation6 + $0xe0] sm:$0xff]
    %v384 = vld [vmem:[#allocation6 + $0xe8] sm:$0xff]
    %v385 = vld [vmem:[#allocation6 + $0xf0] sm:$0xff]
    %v386 = vld [vmem:[#allocation6 + $0xf8] sm:$0xff]
    %v387 = vld [vmem:[%s6] sm:$0x3]
    %v389 = vlaneseq
    %v390 = vshrl.u32 %v389, 7
    %v391 = vsub.s32 0, %v390
    %v392 = vrot.slane %v387, %v391
    %v393 = vlaneseq
    %v394 = vshrl.u32 %v393, 7
    %v395 = vsub.s32 1, %v394
    %v396 = vrot.slane %v387, %v395
    %v431 = vunpack.c.l.b16 %v355
    %v432 = vunpack.c.h.b16 %v355
    %v433 = vunpack.c.l.b16 %v356
    %v434 = vunpack.c.h.b16 %v356
    %v435 = vunpack.c.l.b16 %v357
    %v436 = vunpack.c.h.b16 %v357
    %v437 = vunpack.c.l.b16 %v358
    %v438 = vunpack.c.h.b16 %v358
    %v439 = vunpack.c.l.b16 %v359
    %v440 = vunpack.c.h.b16 %v359
    %v441 = vunpack.c.l.b16 %v360
    %v442 = vunpack.c.h.b16 %v360
    %v443 = vunpack.c.l.b16 %v361
    %v444 = vunpack.c.h.b16 %v361
    %v445 = vunpack.c.l.b16 %v362
    %v446 = vunpack.c.h.b16 %v362
    %v447 = vunpack.c.l.b16 %v363
    %v448 = vunpack.c.h.b16 %v363
    %v449 = vunpack.c.l.b16 %v364
    %v450 = vunpack.c.h.b16 %v364
    %v451 = vunpack.c.l.b16 %v365
    %v452 = vunpack.c.h.b16 %v365
    %v453 = vunpack.c.l.b16 %v366
    %v454 = vunpack.c.h.b16 %v366
    %v455 = vunpack.c.l.b16 %v367
    %v456 = vunpack.c.h.b16 %v367
    %v457 = vunpack.c.l.b16 %v368
    %v458 = vunpack.c.h.b16 %v368
    %v459 = vunpack.c.l.b16 %v369
    %v460 = vunpack.c.h.b16 %v369
    %v461 = vunpack.c.l.b16 %v370
    %v462 = vunpack.c.h.b16 %v370
    %v463 = vunpack.c.l.b16 %v371
    %v464 = vunpack.c.h.b16 %v371
    %v465 = vunpack.c.l.b16 %v372
    %v466 = vunpack.c.h.b16 %v372
    %v467 = vunpack.c.l.b16 %v373
    %v468 = vunpack.c.h.b16 %v373
    %v469 = vunpack.c.l.b16 %v374
    %v470 = vunpack.c.h.b16 %v374
    %v471 = vunpack.c.l.b16 %v375
    %v472 = vunpack.c.h.b16 %v375
    %v473 = vunpack.c.l.b16 %v376
    %v474 = vunpack.c.h.b16 %v376
    %v475 = vunpack.c.l.b16 %v377
    %v476 = vunpack.c.h.b16 %v377
    %v477 = vunpack.c.l.b16 %v378
    %v478 = vunpack.c.h.b16 %v378
    %v479 = vunpack.c.l.b16 %v379
    %v480 = vunpack.c.h.b16 %v379
    %v481 = vunpack.c.l.b16 %v380
    %v482 = vunpack.c.h.b16 %v380
    %v483 = vunpack.c.l.b16 %v381
    %v484 = vunpack.c.h.b16 %v381
    %v485 = vunpack.c.l.b16 %v382
    %v486 = vunpack.c.h.b16 %v382
    %v487 = vunpack.c.l.b16 %v383
    %v488 = vunpack.c.h.b16 %v383
    %v489 = vunpack.c.l.b16 %v384
    %v490 = vunpack.c.h.b16 %v384
    %v491 = vunpack.c.l.b16 %v385
    %v492 = vunpack.c.h.b16 %v385
    %v493 = vunpack.c.l.b16 %v386
    %v494 = vunpack.c.h.b16 %v386
    %v495 = vpack.c.b16 %v433, %v431
    %v496 = vpack.c.b16 %v434, %v432
    %v497 = vpack.c.b16 %v437, %v435
    %v498 = vpack.c.b16 %v438, %v436
    %v499 = vpack.c.b16 %v441, %v439
    %v500 = vpack.c.b16 %v442, %v440
    %v501 = vpack.c.b16 %v445, %v443
    %v502 = vpack.c.b16 %v446, %v444
    %v503 = vpack.c.b16 %v449, %v447
    %v504 = vpack.c.b16 %v450, %v448
    %v505 = vpack.c.b16 %v453, %v451
    %v506 = vpack.c.b16 %v454, %v452
    %v507 = vpack.c.b16 %v457, %v455
    %v508 = vpack.c.b16 %v458, %v456
    %v509 = vpack.c.b16 %v461, %v459
    %v510 = vpack.c.b16 %v462, %v460
    %v511 = vpack.c.b16 %v465, %v463
    %v512 = vpack.c.b16 %v466, %v464
    %v513 = vpack.c.b16 %v469, %v467
    %v514 = vpack.c.b16 %v470, %v468
    %v515 = vpack.c.b16 %v473, %v471
    %v516 = vpack.c.b16 %v474, %v472
    %v517 = vpack.c.b16 %v477, %v475
    %v518 = vpack.c.b16 %v478, %v476
    %v519 = vpack.c.b16 %v481, %v479
    %v520 = vpack.c.b16 %v482, %v480
    %v521 = vpack.c.b16 %v485, %v483
    %v522 = vpack.c.b16 %v486, %v484
    %v523 = vpack.c.b16 %v489, %v487
    %v524 = vpack.c.b16 %v490, %v488
    %v525 = vpack.c.b16 %v493, %v491
    %v526 = vpack.c.b16 %v494, %v492
    %559 = vmatprep.subr.bf16.mxu0 %v496
    %560 = vmatpush1.bf16.msra.mxu0 %v495
    %561 = vmatprep.subr.bf16.mxu0 %v498
    %562 = vmatpush1.bf16.msra.mxu0 %v497
    %563 = vmatprep.subr.bf16.mxu0 %v500
    %564 = vmatpush1.bf16.msra.mxu0 %v499
    %565 = vmatprep.subr.bf16.mxu0 %v502
    %566 = vmatpush1.bf16.msra.mxu0 %v501
    %567 = vmatprep.subr.bf16.mxu0 %v504
    %568 = vmatpush1.bf16.msra.mxu0 %v503
    %569 = vmatprep.subr.bf16.mxu0 %v506
    %570 = vmatpush1.bf16.msra.mxu0 %v505
    %571 = vmatprep.subr.bf16.mxu0 %v508
    %572 = vmatpush1.bf16.msra.mxu0 %v507
    %573 = vmatprep.subr.bf16.mxu0 %v510
    %574 = vmatpush1.bf16.msra.mxu0 %v509
    %575 = vmatprep.subr.bf16.mxu0 %v512
    %576 = vmatpush1.bf16.msra.mxu0 %v511
    %577 = vmatprep.subr.bf16.mxu0 %v514
    %578 = vmatpush1.bf16.msra.mxu0 %v513
    %579 = vmatprep.subr.bf16.mxu0 %v516
    %580 = vmatpush1.bf16.msra.mxu0 %v515
    %581 = vmatprep.subr.bf16.mxu0 %v518
    %582 = vmatpush1.bf16.msra.mxu0 %v517
    %583 = vmatprep.subr.bf16.mxu0 %v520
    %584 = vmatpush1.bf16.msra.mxu0 %v519
    %585 = vmatprep.subr.bf16.mxu0 %v522
    %586 = vmatpush1.bf16.msra.mxu0 %v521
    %587 = vmatprep.subr.bf16.mxu0 %v524
    %588 = vmatpush1.bf16.msra.mxu0 %v523
    %589 = vmatprep.subr.bf16.mxu0 %v526
    %590 = vmatpush1.bf16.msra.mxu0 %v525
    %591 = vmatprep.mubr.bf16.mxu0 %v354
    %592 = vmatmul.mubr.bf16.gmra.mrb[0].mxu0 %v353
    %v593 = vpop.f32.mrb[0].mxu0
    %v594 = vadd.f32 %v392, %v593
    %v595 = vpop.f32.mrb[0].mxu0
    %v596 = vadd.f32 %v396, %v595
    %v597 = vpop.f32.mrb[0].mxu0
    %v598 = vpop.f32.mrb[0].mxu0
    %599 = vdwg.mxu0
    %v600 = vmax.f32 %v594, 0.0
    %v601 = vmax.f32 %v596, 0.0
    %v602 = vpack.c.bf16 %v351, %v351
    %v603 = vpack.c.bf16 %v352, %v352
    %v604 = vld [vmem:[#allocation7] sm:$0xff]
    %v605 = vld [vmem:[#allocation7 + $0x8] sm:$0xff]
    %v606 = vld [vmem:[#allocation7 + $0x10] sm:$0xff]
    %v607 = vld [vmem:[#allocation7 + $0x18] sm:$0xff]
    %v608 = vld [vmem:[#allocation7 + $0x20] sm:$0xff]
    %v609 = vld [vmem:[#allocation7 + $0x28] sm:$0xff]
    %v610 = vld [vmem:[#allocation7 + $0x30] sm:$0xff]
    %v611 = vld [vmem:[#allocation7 + $0x38] sm:$0xff]
    %v612 = vld [vmem:[#allocation7 + $0x40] sm:$0xff]
    %v613 = vld [vmem:[#allocation7 + $0x48] sm:$0xff]
    %v614 = vld [vmem:[#allocation7 + $0x50] sm:$0xff]
    %v615 = vld [vmem:[#allocation7 + $0x58] sm:$0xff]
    %v616 = vld [vmem:[#allocation7 + $0x60] sm:$0xff]
    %v617 = vld [vmem:[#allocation7 + $0x68] sm:$0xff]
    %v618 = vld [vmem:[#allocation7 + $0x70] sm:$0xff]
    %v619 = vld [vmem:[#allocation7 + $0x78] sm:$0xff]
    %v620 = vld [vmem:[#allocation7 + $0x80] sm:$0xff]
    %v621 = vld [vmem:[#allocation7 + $0x88] sm:$0xff]
    %v622 = vld [vmem:[#allocation7 + $0x90] sm:$0xff]
    %v623 = vld [vmem:[#allocation7 + $0x98] sm:$0xff]
    %v624 = vld [vmem:[#allocation7 + $0xa0] sm:$0xff]
    %v625 = vld [vmem:[#allocation7 + $0xa8] sm:$0xff]
    %v626 = vld [vmem:[#allocation7 + $0xb0] sm:$0xff]
    %v627 = vld [vmem:[#allocation7 + $0xb8] sm:$0xff]
    %v628 = vld [vmem:[#allocation7 + $0xc0] sm:$0xff]
    %v629 = vld [vmem:[#allocation7 + $0xc8] sm:$0xff]
    %v630 = vld [vmem:[#allocation7 + $0xd0] sm:$0xff]
    %v631 = vld [vmem:[#allocation7 + $0xd8] sm:$0xff]
    %v632 = vld [vmem:[#allocation7 + $0xe0] sm:$0xff]
    %v633 = vld [vmem:[#allocation7 + $0xe8] sm:$0xff]
    %v634 = vld [vmem:[#allocation7 + $0xf0] sm:$0xff]
    %v635 = vld [vmem:[#allocation7 + $0xf8] sm:$0xff]
    %v636 = vld [vmem:[%s8] sm:$0x3]
    %v638 = vlaneseq
    %v639 = vshrl.u32 %v638, 7
    %v640 = vsub.s32 0, %v639
    %v641 = vrot.slane %v636, %v640
    %v642 = vlaneseq
    %v643 = vshrl.u32 %v642, 7
    %v644 = vsub.s32 1, %v643
    %v645 = vrot.slane %v636, %v644
    %v680 = vunpack.c.l.b16 %v604
    %v681 = vunpack.c.h.b16 %v604
    %v682 = vunpack.c.l.b16 %v605
    %v683 = vunpack.c.h.b16 %v605
    %v684 = vunpack.c.l.b16 %v606
    %v685 = vunpack.c.h.b16 %v606
    %v686 = vunpack.c.l.b16 %v607
    %v687 = vunpack.c.h.b16 %v607
    %v688 = vunpack.c.l.b16 %v608
    %v689 = vunpack.c.h.b16 %v608
    %v690 = vunpack.c.l.b16 %v609
    %v691 = vunpack.c.h.b16 %v609
    %v692 = vunpack.c.l.b16 %v610
    %v693 = vunpack.c.h.b16 %v610
    %v694 = vunpack.c.l.b16 %v611
    %v695 = vunpack.c.h.b16 %v611
    %v696 = vunpack.c.l.b16 %v612
    %v697 = vunpack.c.h.b16 %v612
    %v698 = vunpack.c.l.b16 %v613
    %v699 = vunpack.c.h.b16 %v613
    %v700 = vunpack.c.l.b16 %v614
    %v701 = vunpack.c.h.b16 %v614
    %v702 = vunpack.c.l.b16 %v615
    %v703 = vunpack.c.h.b16 %v615
    %v704 = vunpack.c.l.b16 %v616
    %v705 = vunpack.c.h.b16 %v616
    %v706 = vunpack.c.l.b16 %v617
    %v707 = vunpack.c.h.b16 %v617
    %v708 = vunpack.c.l.b16 %v618
    %v709 = vunpack.c.h.b16 %v618
    %v710 = vunpack.c.l.b16 %v619
    %v711 = vunpack.c.h.b16 %v619
    %v712 = vunpack.c.l.b16 %v620
    %v713 = vunpack.c.h.b16 %v620
    %v714 = vunpack.c.l.b16 %v621
    %v715 = vunpack.c.h.b16 %v621
    %v716 = vunpack.c.l.b16 %v622
    %v717 = vunpack.c.h.b16 %v622
    %v718 = vunpack.c.l.b16 %v623
    %v719 = vunpack.c.h.b16 %v623
    %v720 = vunpack.c.l.b16 %v624
    %v721 = vunpack.c.h.b16 %v624
    %v722 = vunpack.c.l.b16 %v625
    %v723 = vunpack.c.h.b16 %v625
    %v724 = vunpack.c.l.b16 %v626
    %v725 = vunpack.c.h.b16 %v626
    %v726 = vunpack.c.l.b16 %v627
    %v727 = vunpack.c.h.b16 %v627
    %v728 = vunpack.c.l.b16 %v628
    %v729 = vunpack.c.h.b16 %v628
    %v730 = vunpack.c.l.b16 %v629
    %v731 = vunpack.c.h.b16 %v629
    %v732 = vunpack.c.l.b16 %v630
    %v733 = vunpack.c.h.b16 %v630
    %v734 = vunpack.c.l.b16 %v631
    %v735 = vunpack.c.h.b16 %v631
    %v736 = vunpack.c.l.b16 %v632
    %v737 = vunpack.c.h.b16 %v632
    %v738 = vunpack.c.l.b16 %v633
    %v739 = vunpack.c.h.b16 %v633
    %v740 = vunpack.c.l.b16 %v634
    %v741 = vunpack.c.h.b16 %v634
    %v742 = vunpack.c.l.b16 %v635
    %v743 = vunpack.c.h.b16 %v635
    %v744 = vpack.c.b16 %v682, %v680
    %v745 = vpack.c.b16 %v683, %v681
    %v746 = vpack.c.b16 %v686, %v684
    %v747 = vpack.c.b16 %v687, %v685
    %v748 = vpack.c.b16 %v690, %v688
    %v749 = vpack.c.b16 %v691, %v689
    %v750 = vpack.c.b16 %v694, %v692
    %v751 = vpack.c.b16 %v695, %v693
    %v752 = vpack.c.b16 %v698, %v696
    %v753 = vpack.c.b16 %v699, %v697
    %v754 = vpack.c.b16 %v702, %v700
    %v755 = vpack.c.b16 %v703, %v701
    %v756 = vpack.c.b16 %v706, %v704
    %v757 = vpack.c.b16 %v707, %v705
    %v758 = vpack.c.b16 %v710, %v708
    %v759 = vpack.c.b16 %v711, %v709
    %v760 = vpack.c.b16 %v714, %v712
    %v761 = vpack.c.b16 %v715, %v713
    %v762 = vpack.c.b16 %v718, %v716
    %v763 = vpack.c.b16 %v719, %v717
    %v764 = vpack.c.b16 %v722, %v720
    %v765 = vpack.c.b16 %v723, %v721
    %v766 = vpack.c.b16 %v726, %v724
    %v767 = vpack.c.b16 %v727, %v725
    %v768 = vpack.c.b16 %v730, %v728
    %v769 = vpack.c.b16 %v731, %v729
    %v770 = vpack.c.b16 %v734, %v732
    %v771 = vpack.c.b16 %v735, %v733
    %v772 = vpack.c.b16 %v738, %v736
    %v773 = vpack.c.b16 %v739, %v737
    %v774 = vpack.c.b16 %v742, %v740
    %v775 = vpack.c.b16 %v743, %v741
    %808 = vmatprep.subr.bf16.mxu0 %v745
    %809 = vmatpush1.bf16.msra.mxu0 %v744
    %810 = vmatprep.subr.bf16.mxu0 %v747
    %811 = vmatpush1.bf16.msra.mxu0 %v746
    %812 = vmatprep.subr.bf16.mxu0 %v749
    %813 = vmatpush1.bf16.msra.mxu0 %v748
    %814 = vmatprep.subr.bf16.mxu0 %v751
    %815 = vmatpush1.bf16.msra.mxu0 %v750
    %816 = vmatprep.subr.bf16.mxu0 %v753
    %817 = vmatpush1.bf16.msra.mxu0 %v752
    %818 = vmatprep.subr.bf16.mxu0 %v755
    %819 = vmatpush1.bf16.msra.mxu0 %v754
    %820 = vmatprep.subr.bf16.mxu0 %v757
    %821 = vmatpush1.bf16.msra.mxu0 %v756
    %822 = vmatprep.subr.bf16.mxu0 %v759
    %823 = vmatpush1.bf16.msra.mxu0 %v758
    %824 = vmatprep.subr.bf16.mxu0 %v761
    %825 = vmatpush1.bf16.msra.mxu0 %v760
    %826 = vmatprep.subr.bf16.mxu0 %v763
    %827 = vmatpush1.bf16.msra.mxu0 %v762
    %828 = vmatprep.subr.bf16.mxu0 %v765
    %829 = vmatpush1.bf16.msra.mxu0 %v764
    %830 = vmatprep.subr.bf16.mxu0 %v767
    %831 = vmatpush1.bf16.msra.mxu0 %v766
    %832 = vmatprep.subr.bf16.mxu0 %v769
    %833 = vmatpush1.bf16.msra.mxu0 %v768
    %834 = vmatprep.subr.bf16.mxu0 %v771
    %835 = vmatpush1.bf16.msra.mxu0 %v770
    %836 = vmatprep.subr.bf16.mxu0 %v773
    %837 = vmatpush1.bf16.msra.mxu0 %v772
    %838 = vmatprep.subr.bf16.mxu0 %v775
    %839 = vmatpush1.bf16.msra.mxu0 %v774
    %840 = vmatprep.mubr.bf16.mxu0 %v603
    %841 = vmatmul.mubr.bf16.gmra.mrb[0].mxu0 %v602
    %v842 = vpop.f32.mrb[0].mxu0
    %v843 = vadd.f32 %v641, %v842
    %v844 = vpop.f32.mrb[0].mxu0
    %v845 = vadd.f32 %v645, %v844
    %v846 = vpop.f32.mrb[0].mxu0
    %v847 = vpop.f32.mrb[0].mxu0
    %848 = vdwg.mxu0
    %v849 = vmax.f32 %v843, 0.0
    %v850 = vmax.f32 %v845, 0.0
    %v851 = vld [vmem:[%s9] ss:$2 sm:$0x3]
    %v853 = vlaneseq
    %v854 = vshrl.u32 %v853, 7
    %v855 = vsub.s32 0, %v854
    %v856 = vrot.slane %v851, %v855
    %v857 = vlaneseq
    %v858 = vshrl.u32 %v857, 7
    %v859 = vsub.s32 1, %v858
    %v860 = vrot.slane %v851, %v859
    %v863 = vmul.f32 %v600, %v856
    %v864 = vmul.f32 %v601, %v860
    %v865 = vadd.f32 %v863, %v864
    %866 = vadd.xlane.f32.xlu0 %v865
    %v867 = vpop.xlane.xlu0 %866
    %s868 = scalar_lea.vmem %s9, 1
    %v869 = vld [vmem:[%s868] ss:$2 sm:$0x3]
    %v871 = vlaneseq
    %v872 = vshrl.u32 %v871, 7
    %v873 = vsub.s32 0, %v872
    %v874 = vrot.slane %v869, %v873
    %v875 = vlaneseq
    %v876 = vshrl.u32 %v875, 7
    %v877 = vsub.s32 1, %v876
    %v878 = vrot.slane %v869, %v877
    %v881 = vmul.f32 %v849, %v874
    %v882 = vmul.f32 %v850, %v878
    %v883 = vadd.f32 %v881, %v882
    %884 = vadd.xlane.f32.xlu0 %v883
    %v885 = vpop.xlane.xlu0 %884
    %v886 = vlaneseq
    %v887 = vand.u32 %v886, 127
    %vm888 = vcmp.eq.s32.totalorder %v887, 0
    %v889 = vsel %vm888, %v867, %v885
    %v890 = vld [vmem:[%s10] sm:$0x1]
    %v892 = vlaneseq
    %v893 = vshrl.u32 %v892, 7
    %v894 = vsub.s32 0, %v893
    %v895 = vrot.slane %v890, %v894
    %v897 = vadd.f32 %v889, %v895
    %vm898 = vcmask 15360
    %899 = vst.msk [vmem:[%s11] sm:$0xff] %vm898, %v897
    // Predicated region
    $region62: #{tpu_custom_call.1} parent=1 // pred_check
      _
    $region63: #{tpu_custom_call.1} parent=1 // pred_check_branch
      %901 = sbr.rel (0) target = $region65
    $region64: #{tpu_custom_call.1} parent=1 // pred_region
      _
    $region65: #{tpu_custom_call.1} parent=1 // pred_fallthru
      _
    // Predicated region
    $region66: #{tpu_custom_call.1} parent=1 // pred_check
      _
    $region67: #{tpu_custom_call.1} parent=1 // pred_check_branch
      %903 = sbr.rel (0) target = $region69
    $region68: #{tpu_custom_call.1} parent=1 // pred_region
      _
    $region69: #{tpu_custom_call.1} parent=1 // pred_fallthru
      _
    %904 = vsyncpa [#allocation3], 1
    %905 = vsyncpa [#allocation5], 1
    %906 = vsyncpa [#allocation8], 1

</llo_original>
